<compile_context>
chip_gen: v6e
topology: v6e:2x2x1
jax: 0.10.0
libtpu: 0.0.40
codegen_flags: <defaults>
</compile_context>

<pallas_src>
import functools

import jax
import jax.numpy as jnp
from jax.experimental import pallas as pl
from jax.experimental.pallas import tpu as pltpu

C_PAD = 128  # lane-dense padded output-channel count


# ----------------------------- Pallas kernel ------------------------------- #

def _down_fused_kernel(p_ref, w_ref, o_ref, y_scr, sum_scr, ssq_scr,
                       *, m_total, batch_norm, neg_slope, eps):
    """Fused im2col-matmul + batch stats + BatchNorm + LeakyReLU.

    grid = (2, MT):
      pass 0: y = P_tile @ W_pad (bf16 in, f32 acc) -> resident VMEM scratch,
              accumulate per-channel sum / sum-of-squares.
      pass 1: normalize with the completed batch stats, apply LeakyReLU, emit.
    """
    pass_id = pl.program_id(0)
    mi = pl.program_id(1)

    @pl.when(pass_id == 0)
    def _():
        @pl.when(mi == 0)
        def _():
            sum_scr[...] = jnp.zeros_like(sum_scr)
            ssq_scr[...] = jnp.zeros_like(ssq_scr)

        y = jnp.dot(p_ref[...], w_ref[...], preferred_element_type=jnp.float32)
        y_scr[mi] = y
        if batch_norm:
            sum_scr[...] += jnp.sum(y, axis=0, keepdims=True)
            ssq_scr[...] += jnp.sum(y * y, axis=0, keepdims=True)
        # Keep the (possibly written-back) output buffer initialized; pass 1
        # overwrites the same block with the final values.
        o_ref[...] = y

    @pl.when(pass_id == 1)
    def _():
        y = y_scr[mi]
        if batch_norm:
            inv_m = 1.0 / float(m_total)
            mean = sum_scr[...] * inv_m                       # (1, C_PAD)
            var = ssq_scr[...] * inv_m - mean * mean
            y = (y - mean) * jax.lax.rsqrt(var + eps)
        o_ref[...] = jnp.where(y >= 0.0, y, neg_slope * y)


# ------------------------------- Wrapper ------------------------------------ #

def _im2col(x_nchw):
    """(N, C, H, W) -> patch matrix (N*OH*OW, C*16), kernel 4x4, stride 2, pad 1."""
    n, c, h, w = x_nchw.shape
    oh, ow = h // 2, w // 2
    xp = jnp.pad(x_nchw, ((0, 0), (0, 0), (1, 1), (1, 1)))
    cols = []
    for kh in range(4):
        for kw in range(4):
            cols.append(xp[:, :, kh:kh + 2 * oh:2, kw:kw + 2 * ow:2])  # (N,C,OH,OW)
    patches = jnp.stack(cols, axis=-1)                                 # (N,C,OH,OW,16)
    patches = jnp.transpose(patches, (0, 2, 3, 1, 4)).reshape(n * oh * ow, c * 16)
    return patches, (n, oh, ow)


@functools.partial(jax.jit, static_argnames=("batch_norm",))
def down_module_forward(x, weight, batch_norm=True):
    """x: (N, C_in, H, W) f32; weight: (C_out, C_in, 4, 4) f32 (no bias)."""
    c_out = weight.shape[0]
    patches, (n, oh, ow) = _im2col(x.astype(jnp.float32))
    m, k = patches.shape

    # bf16 MXU operands; accumulation & BN math stay f32 inside the kernel.
    patches_bf16 = patches.astype(jnp.bfloat16)
    w_mat = weight.reshape(c_out, -1).T.astype(jnp.float32)            # (K, c_out)
    w_pad = jnp.zeros((k, C_PAD), jnp.float32).at[:, :c_out].set(w_mat)
    w_pad = w_pad.astype(jnp.bfloat16)

    # Largest tile (up to 2048 rows) that divides M; falls back to full M.
    tm = m
    for cand in (2048, 1024, 512, 256, 128, 64, 32, 16, 8):
        if m >= cand and m % cand == 0:
            tm = cand
            break
    mt = m // tm

    kernel = functools.partial(
        _down_fused_kernel, m_total=m, batch_norm=batch_norm,
        neg_slope=0.3, eps=1e-5)

    out_pad = pl.pallas_call(
        kernel,
        out_shape=jax.ShapeDtypeStruct((m, C_PAD), jnp.float32),
        grid_spec=pltpu.PrefetchScalarGridSpec(
            num_scalar_prefetch=0,
            grid=(2, mt),                                   # (pass, M-tile)
            in_specs=[
                pl.BlockSpec((tm, k), lambda p, i: (i, 0)),
                pl.BlockSpec((k, C_PAD), lambda p, i: (0, 0)),
            ],
            out_specs=pl.BlockSpec((tm, C_PAD), lambda p, i: (i, 0)),
            scratch_shapes=[
                pltpu.VMEM((mt, tm, C_PAD), jnp.float32),   # resident conv output
                pltpu.VMEM((1, C_PAD), jnp.float32),        # per-channel sum
                pltpu.VMEM((1, C_PAD), jnp.float32),        # per-channel sum of squares
            ],
        ),
        compiler_params=pltpu.CompilerParams(
            dimension_semantics=("arbitrary", "arbitrary")),
    )(patches_bf16, w_pad)

    out = out_pad[:, :c_out]                                # drop padded lanes
    return jnp.transpose(out.reshape(n, oh, ow, c_out), (0, 3, 1, 2))


# ----------------------------- Pure-JAX reference --------------------------- #

def _reference(x, weight, batch_norm=True, conv_dtype=jnp.float32):
    y = jax.lax.conv_general_dilated(
        x.astype(conv_dtype), weight.astype(conv_dtype),
        window_strides=(2, 2), padding=((1, 1), (1, 1)),
        dimension_numbers=("NCHW", "OIHW", "NCHW"),
        preferred_element_type=jnp.float32)
    if batch_norm:
        mean = jnp.mean(y, axis=(0, 2, 3), keepdims=True)
        var = jnp.mean((y - mean) ** 2, axis=(0, 2, 3), keepdims=True)
        y = (y - mean) / jnp.sqrt(var + 1e-5)
    return jnp.where(y >= 0.0, y, 0.3 * y)


# ----------------------------------- Main ----------------------------------- #

if __name__ == "__main__":
    # Down_module(in_channel=4, out_channel=8), input (2, 4, 16, 16)
    in_channel, out_channel = 4, 8
    key = jax.random.PRNGKey(0)
    k_w, k_x = jax.random.split(key)

    # init_layer: weight ~ Normal(mean=0.0, std=0.02), bias=False
    weight = 0.02 * jax.random.normal(
        k_w, (out_channel, in_channel, 4, 4), dtype=jnp.float32)
    x = jax.random.normal(k_x, (2, in_channel, 16, 16), dtype=jnp.float32)

    out = jax.block_until_ready(down_module_forward(x, weight, batch_norm=True))
    assert out.shape == (2, out_channel, 8, 8), out.shape

    # Reference that mirrors the kernel's mixed precision (bf16 operands,
    # f32 accumulation / BN math) — should match tightly.
    ref_mixed = _reference(x, weight, True, conv_dtype=jnp.bfloat16)
    assert jnp.allclose(out, ref_mixed, atol=2e-4, rtol=1e-3), float(
        jnp.max(jnp.abs(out - ref_mixed)))

    # Sanity check against the pure-f32 module (only bf16 operand rounding).
    ref_f32 = _reference(x, weight, True, conv_dtype=jnp.float32)
    assert jnp.allclose(out, ref_f32, atol=5e-2, rtol=0.0), float(
        jnp.max(jnp.abs(out - ref_f32)))

    print("KERNEL_OK")
</pallas_src>

<mosaic_0001>
module attributes {stable_mosaic.version = 11 : i64} {
  func.func @_down_fused_kernel(%arg0: i32, %arg1: i32, %arg2: memref<128x64xbf16, #tpu.memory_space<vmem>>, %arg3: memref<64x128xbf16, #tpu.memory_space<vmem>>, %arg4: memref<128x128xf32, #tpu.memory_space<vmem>>, %arg5: memref<1x128x128xf32, #tpu.memory_space<vmem>>, %arg6: memref<1x128xf32, #tpu.memory_space<vmem>>, %arg7: memref<1x128xf32, #tpu.memory_space<vmem>>) attributes {dimension_semantics = [#tpu.dimension_semantics<arbitrary>, #tpu.dimension_semantics<arbitrary>], iteration_bounds = array<i64: 2, 1>, scalar_prefetch = 0 : i64, scratch_operands = 3 : i64, tpu.core_type = #tpu.core_type<tc>, window_params = [{transform_indices = @transform_0, window_bounds = array<i64: 128, 64>}, {pipeline_mode = #tpu.pipeline_mode<synchronous>, transform_indices = @transform_1, window_bounds = array<i64: 64, 128>}, {transform_indices = @transform_2, window_bounds = array<i64: 128, 128>}]} {
    %c0_i32 = arith.constant 0 : i32
    %0 = arith.cmpi eq, %arg0, %c0_i32 : i32
    %1 = arith.extui %0 : i1 to i32
    %c0_i32_0 = arith.constant 0 : i32
    %2 = arith.cmpi ne, %1, %c0_i32_0 : i32
    scf.if %2 {
      %c0_i32_2 = arith.constant 0 : i32
      %6 = arith.cmpi eq, %arg1, %c0_i32_2 : i32
      %7 = arith.extui %6 : i1 to i32
      %c0_i32_3 = arith.constant 0 : i32
      %8 = arith.cmpi ne, %7, %c0_i32_3 : i32
      scf.if %8 {
        %cst_21 = arith.constant 0.000000e+00 : f32
        %28 = vector.broadcast %cst_21 : f32 to vector<1x128xf32>
        %c0_22 = arith.constant 0 : index
        %c0_23 = arith.constant 0 : index
        %29 = vector.load %arg6[%c0_22, %c0_23] : memref<1x128xf32, #tpu.memory_space<vmem>>, vector<1x128xf32>
        tpu.vector_store %arg6[%c0_22, %c0_23], %28 {strides = array<i32>} : memref<1x128xf32, #tpu.memory_space<vmem>>, vector<1x128xf32>,
        %cst_24 = arith.constant 0.000000e+00 : f32
        %30 = vector.broadcast %cst_24 : f32 to vector<1x128xf32>
        %c0_25 = arith.constant 0 : index
        %c0_26 = arith.constant 0 : index
        %31 = vector.load %arg7[%c0_25, %c0_26] : memref<1x128xf32, #tpu.memory_space<vmem>>, vector<1x128xf32>
        tpu.vector_store %arg7[%c0_25, %c0_26], %30 {strides = array<i32>} : memref<1x128xf32, #tpu.memory_space<vmem>>, vector<1x128xf32>,
      } else {
      }
      %c0 = arith.constant 0 : index
      %c0_4 = arith.constant 0 : index
      %9 = vector.load %arg2[%c0, %c0_4] : memref<128x64xbf16, #tpu.memory_space<vmem>>, vector<128x64xbf16>
      %c0_5 = arith.constant 0 : index
      %c0_6 = arith.constant 0 : index
      %10 = vector.load %arg3[%c0_5, %c0_6] : memref<64x128xbf16, #tpu.memory_space<vmem>>, vector<64x128xbf16>
      %cst = arith.constant dense<0.000000e+00> : vector<128x128xf32>
      %11 = tpu.matmul %9, %10, %cst {dimension_numbers = #tpu.dot_dimension_numbers<[1], [0], [0], [1], [0, 0, 1, 1], [], []>} : vector<128x64xbf16>, vector<64x128xbf16>, vector<128x128xf32> -> vector<128x128xf32>
      %12 = arith.index_cast %arg1 : i32 to index
      %c0_7 = arith.constant 0 : index
      %c0_8 = arith.constant 0 : index
      %13 = vector.load %arg5[%12, %c0_7, %c0_8] : memref<1x128x128xf32, #tpu.memory_space<vmem>>, vector<1x128x128xf32>
      %14 = vector.shape_cast %13 : vector<1x128x128xf32> to vector<128x128xf32>
      %15 = vector.shape_cast %11 : vector<128x128xf32> to vector<1x128x128xf32>
      tpu.vector_store %arg5[%12, %c0_7, %c0_8], %15 {strides = array<i32>} : memref<1x128x128xf32, #tpu.memory_space<vmem>>, vector<1x128x128xf32>,
      %c0_9 = arith.constant 0 : index
      %c0_10 = arith.constant 0 : index
      %16 = vector.load %arg6[%c0_9, %c0_10] : memref<1x128xf32, #tpu.memory_space<vmem>>, vector<1x128xf32>
      %cst_11 = arith.constant dense<0.000000e+00> : vector<128xf32>
      %17 = vector.multi_reduction <add>, %11, %cst_11 [0] : vector<128x128xf32> to vector<128xf32>
      %18 = vector.shape_cast %17 : vector<128xf32> to vector<1x128xf32>
      %19 = arith.addf %16, %18 : vector<1x128xf32>
      %c0_12 = arith.constant 0 : index
      %c0_13 = arith.constant 0 : index
      %20 = vector.load %arg6[%c0_12, %c0_13] : memref<1x128xf32, #tpu.memory_space<vmem>>, vector<1x128xf32>
      tpu.vector_store %arg6[%c0_12, %c0_13], %19 {strides = array<i32>} : memref<1x128xf32, #tpu.memory_space<vmem>>, vector<1x128xf32>,
      %c0_14 = arith.constant 0 : index
      %c0_15 = arith.constant 0 : index
      %21 = vector.load %arg7[%c0_14, %c0_15] : memref<1x128xf32, #tpu.memory_space<vmem>>, vector<1x128xf32>
      %22 = arith.mulf %11, %11 : vector<128x128xf32>
      %cst_16 = arith.constant dense<0.000000e+00> : vector<128xf32>
      %23 = vector.multi_reduction <add>, %22, %cst_16 [0] : vector<128x128xf32> to vector<128xf32>
      %24 = vector.shape_cast %23 : vector<128xf32> to vector<1x128xf32>
      %25 = arith.addf %21, %24 : vector<1x128xf32>
      %c0_17 = arith.constant 0 : index
      %c0_18 = arith.constant 0 : index
      %26 = vector.load %arg7[%c0_17, %c0_18] : memref<1x128xf32, #tpu.memory_space<vmem>>, vector<1x128xf32>
      tpu.vector_store %arg7[%c0_17, %c0_18], %25 {strides = array<i32>} : memref<1x128xf32, #tpu.memory_space<vmem>>, vector<1x128xf32>,
      %c0_19 = arith.constant 0 : index
      %c0_20 = arith.constant 0 : index
      %27 = vector.load %arg4[%c0_19, %c0_20] : memref<128x128xf32, #tpu.memory_space<vmem>>, vector<128x128xf32>
      tpu.vector_store %arg4[%c0_19, %c0_20], %11 {strides = array<i32>} : memref<128x128xf32, #tpu.memory_space<vmem>>, vector<128x128xf32>,
    } else {
    }
    %c1_i32 = arith.constant 1 : i32
    %3 = arith.cmpi eq, %arg0, %c1_i32 : i32
    %4 = arith.extui %3 : i1 to i32
    %c0_i32_1 = arith.constant 0 : i32
    %5 = arith.cmpi ne, %4, %c0_i32_1 : i32
    scf.if %5 {
      %6 = arith.index_cast %arg1 : i32 to index
      %c0 = arith.constant 0 : index
      %c0_2 = arith.constant 0 : index
      %7 = vector.load %arg5[%6, %c0, %c0_2] : memref<1x128x128xf32, #tpu.memory_space<vmem>>, vector<1x128x128xf32>
      %8 = vector.shape_cast %7 : vector<1x128x128xf32> to vector<128x128xf32>
      %c0_3 = arith.constant 0 : index
      %c0_4 = arith.constant 0 : index
      %9 = vector.load %arg6[%c0_3, %c0_4] : memref<1x128xf32, #tpu.memory_space<vmem>>, vector<1x128xf32>
      %cst = arith.constant 7.812500e-03 : f32
      %10 = vector.broadcast %cst : f32 to vector<1x128xf32>
      %11 = arith.mulf %9, %10 : vector<1x128xf32>
      %c0_5 = arith.constant 0 : index
      %c0_6 = arith.constant 0 : index
      %12 = vector.load %arg7[%c0_5, %c0_6] : memref<1x128xf32, #tpu.memory_space<vmem>>, vector<1x128xf32>
      %cst_7 = arith.constant 7.812500e-03 : f32
      %13 = vector.broadcast %cst_7 : f32 to vector<1x128xf32>
      %14 = arith.mulf %12, %13 : vector<1x128xf32>
      %15 = arith.mulf %11, %11 : vector<1x128xf32>
      %16 = arith.subf %14, %15 : vector<1x128xf32>
      %17 = vector.broadcast %11 : vector<1x128xf32> to vector<128x128xf32>
      %18 = arith.subf %8, %17 : vector<128x128xf32>
      %cst_8 = arith.constant 9.99999974E-6 : f32
      %19 = vector.broadcast %cst_8 : f32 to vector<1x128xf32>
      %20 = arith.addf %16, %19 : vector<1x128xf32>
      %21 = math.rsqrt %20 : vector<1x128xf32>
      %22 = vector.broadcast %21 : vector<1x128xf32> to vector<128x128xf32>
      %23 = arith.mulf %18, %22 : vector<128x128xf32>
      %cst_9 = arith.constant 0.000000e+00 : f32
      %24 = vector.broadcast %cst_9 : f32 to vector<128x128xf32>
      %25 = arith.cmpf oge, %23, %24 : vector<128x128xf32>
      %cst_10 = arith.constant 3.000000e-01 : f32
      %26 = vector.broadcast %cst_10 : f32 to vector<128x128xf32>
      %27 = arith.mulf %26, %23 : vector<128x128xf32>
      %28 = arith.select %25, %23, %27 : vector<128x128xi1>, vector<128x128xf32>
      %c0_11 = arith.constant 0 : index
      %c0_12 = arith.constant 0 : index
      %29 = vector.load %arg4[%c0_11, %c0_12] : memref<128x128xf32, #tpu.memory_space<vmem>>, vector<128x128xf32>
      tpu.vector_store %arg4[%c0_11, %c0_12], %28 {strides = array<i32>} : memref<128x128xf32, #tpu.memory_space<vmem>>, vector<128x128xf32>,
    } else {
    }
    return
  }
  func.func @transform_0(%arg0: i32, %arg1: i32) -> (i32, i32) {
    %c0_i32 = arith.constant 0 : i32
    %c0_i32_0 = arith.constant 0 : i32
    return %arg1, %c0_i32 : i32, i32
  }
  func.func @transform_1(%arg0: i32, %arg1: i32) -> (i32, i32) {
    %c0_i32 = arith.constant 0 : i32
    %c0_i32_0 = arith.constant 0 : i32
    %c0_i32_1 = arith.constant 0 : i32
    return %c0_i32, %c0_i32_0 : i32, i32
  }
  func.func @transform_2(%arg0: i32, %arg1: i32) -> (i32, i32) {
    %c0_i32 = arith.constant 0 : i32
    %c0_i32_0 = arith.constant 0 : i32
    return %arg1, %c0_i32 : i32, i32
  }
}

</mosaic_0001>

<llo_original>
// kernel: down_module_forward.1
$region0: #{down_module_forward.1}
  #allocation0 [shape = 'u32[]', space=smem, size = 0x4, offset = 0x4, fixed_abs, tag = 'smem constant byte address 0x4 - core index']
  #allocation1 [shape = 'u32[144,128]{1,0:T(1,128)}', space=vmem, size = 0x12000, scoped, tag = 'internal scratch']
  #allocation2 [shape = 'f32[1,128,128]{2,1,0:T(8,128)}', space=vmem, size = 0x10000, scoped, tag = 'scratch operand']
  #allocation3 [shape = 'f32[1,128]{1,0:T(1,128)}', space=vmem, size = 0x200, scoped, tag = 'scratch operand']
  #allocation4 [shape = 'f32[1,128]{1,0:T(1,128)}', space=vmem, size = 0x200, scoped, tag = 'scratch operand']
  %s0 = inlined_call_operand.vmem [shape: bf16[128,64], index: 0, kind: input, shape index: {}]
  %s1 = inlined_call_operand.vmem [shape: bf16[64,128], index: 1, kind: input, shape index: {}]
  %s2 = inlined_call_operand.vmem [shape: f32[128,128], index: 2, kind: output, shape index: {}]
  %s3 = sld [smem:[#allocation0]]
  $region53: #{down_module_forward.1} parent=0
    _
  %s5 = ssub.s32 1, %s3
  %s6 = scalar_select 0, %s5, %s3
  loop: start=0, step=1, limit=4
  $region2: #{down_module_forward.1} parent=0 // loop_pre_header
    _
  $region3: #{down_module_forward.1} parent=0 // loop_header
    %s8 = sphi 0, %s12
    %p9 = scmp.ge.s32.totalorder %s8, 4
    %s15 = sphi 0, %s27
    %s16 = sphi 0, %s23
    %s17 = sphi 0, %s15
    %s18 = sphi 0, %s16
    %s19 = sphi 0, %s17
    %s20 = sphi 0, %s18
    %s30 = sphi 0, %s32
    %s33 = sphi 0, %s30
    %s34 = sphi 0, %s33
    %s50 = sphi 0, %s34
    %s54 = sphi 0, %s54
    %s56 = sphi 0, %s54
    %s57 = sphi 0, %s56
    %s71 = sphi 0, %s57
    %s77 = sphi 0, %s79
    %s80 = sphi 0, %s77
    %s81 = sphi 0, %s80
    %s97 = sphi 0, %s81
  $region4: #{down_module_forward.1} parent=0 // loop_header_branch
    %11 = sbr.rel (%p9) target = $region8
  $region5: #{down_module_forward.1} parent=0 // loop_body
    %s13 = ssub.s32 %s8, 1
    %s14 = ssub.s32 %s8, 2
    %s21 = sadd.s32 1, %s16
    %p22 = scmp.ge.s32.totalorder %s21, 1
    %s23 = scalar_select %p22, 0, %s21
    %s24 = sadd.s32 1, %s15
    %s25 = scalar_select %p22, %s24, %s15
    %p26 = scmp.ge.s32.totalorder %s25, 2
    %s27 = scalar_select %p26, 0, %s25
    %s28 = ssub.s32 %s16, %s23
    %p29 = scmp.eq.s32.totalorder %s28, 0
    %s31 = sadd.s32 %s30, 1
    %s32 = scalar_select %p29, %s30, %s31
    %p35 = pneg %p29
    %p36 = scmp.eq.s32.totalorder %s8, 1
    %p37 = por %p35, %p36
    %p38 = scmp.ne.s32.totalorder %s30, %s33
    %p39 = scmp.eq.s32.totalorder %s8, 0
    %p40 = por %p38, %p39
    %p41 = scmp.ne.s32.totalorder %s30, %s33
    %p42 = scmp.eq.s32.totalorder %s13, 1
    %p43 = por %p41, %p42
    %p44 = scmp.ne.s32.totalorder %s33, %s34
    %p45 = scmp.eq.s32.totalorder %s13, 0
    %p46 = por %p44, %p45
    %p47 = scmp.ne.s32.totalorder %s33, %s34
    %p48 = scmp.eq.s32.totalorder %s14, 1
    %p49 = por %p47, %p48
    %p51 = scmp.ne.s32.totalorder %s34, %s50
    %p52 = scmp.eq.s32.totalorder %s14, 0
    %p53 = por %p51, %p52
    %s55 = sadd.s32 %s54, 1
    %p58 = scmp.eq.s32.totalorder %s8, 1
    %p59 = scmp.ne.s32.totalorder %s54, %s56
    %p60 = scmp.eq.s32.totalorder %s8, 0
    %p61 = por %p59, %p60
    %p62 = scmp.ne.s32.totalorder %s54, %s56
    %p63 = scmp.eq.s32.totalorder %s13, 1
    %p64 = por %p62, %p63
    %p65 = scmp.ne.s32.totalorder %s56, %s57
    %p66 = scmp.eq.s32.totalorder %s13, 0
    %p67 = por %p65, %p66
    %p68 = scmp.ne.s32.totalorder %s56, %s57
    %p69 = scmp.eq.s32.totalorder %s14, 1
    %p70 = por %p68, %p69
    %p72 = scmp.ne.s32.totalorder %s57, %s71
    %p73 = scmp.eq.s32.totalorder %s14, 0
    %p74 = por %p72, %p73
    %s75 = ssub.s32 %s16, %s23
    %p76 = scmp.eq.s32.totalorder %s75, 0
    %s78 = sadd.s32 %s77, 1
    %s79 = scalar_select %p76, %s77, %s78
    %p82 = pneg %p76
    %p83 = scmp.eq.s32.totalorder %s8, 1
    %p84 = por %p82, %p83
    %p85 = scmp.ne.s32.totalorder %s77, %s80
    %p86 = scmp.eq.s32.totalorder %s8, 0
    %p87 = por %p85, %p86
    %p88 = scmp.ne.s32.totalorder %s77, %s80
    %p89 = scmp.eq.s32.totalorder %s13, 1
    %p90 = por %p88, %p89
    %p91 = scmp.ne.s32.totalorder %s80, %s81
    %p92 = scmp.eq.s32.totalorder %s13, 0
    %p93 = por %p91, %p92
    %p94 = scmp.ne.s32.totalorder %s80, %s81
    %p95 = scmp.eq.s32.totalorder %s14, 1
    %p96 = por %p94, %p95
    %p98 = scmp.ne.s32.totalorder %s81, %s97
    %p99 = scmp.eq.s32.totalorder %s14, 0
    %p100 = por %p98, %p99
    %p101 = scmp.le.s32.totalorder 1, %s8
    %p102 = scmp.lt.s32.totalorder %s8, 3
    %p103 = pnand %p101, %p102
    %p104 = pneg %p103
    // Predicated region
    $region9: #{down_module_forward.1} parent=5 // pred_check
      _
    $region10: #{down_module_forward.1} parent=5 // pred_check_branch
      %106 = sbr.rel (%p103) target = $region12
    $region11: #{down_module_forward.1} parent=5 // pred_region
      %s107 = ssub.s32 %s8, 1
      // Predicated region
      $region13: #{down_module_forward.1} parent=11 // pred_check
        %p108 = pneg %p46
      $region14: #{down_module_forward.1} parent=11 // pred_check_branch
        %110 = sbr.rel (%p108) target = $region16
      $region15: #{down_module_forward.1} parent=11 // pred_region
        %s111 = smul.u32 16, %s18
        %p112 = scmp.lt.s32.totalorder %s111, 15
        %s113 = scalar_select %p112, %s111, 15
        %s114 = smul.addr %s113, 4
        %s115 = scalar_lea.vmem %s0, %s114
        %s116 = smul.u32 16, %s18
      $region16: #{down_module_forward.1} parent=11 // pred_fallthru
        _
      // Predicated region
      $region17: #{down_module_forward.1} parent=11 // pred_check
        %p117 = pneg %p67
      $region18: #{down_module_forward.1} parent=11 // pred_check_branch
        %119 = sbr.rel (%p117) target = $region20
      $region19: #{down_module_forward.1} parent=11 // pred_region
        _
      $region20: #{down_module_forward.1} parent=11 // pred_fallthru
        _
    $region12: #{down_module_forward.1} parent=5 // pred_fallthru
      _
    %p120 = scmp.lt.s32.totalorder %s8, 2
    // Predicated region
    $region21: #{down_module_forward.1} parent=5 // pred_check
      %p121 = pneg %p120
    $region22: #{down_module_forward.1} parent=5 // pred_check_branch
      %123 = sbr.rel (%p121) target = $region24
    $region23: #{down_module_forward.1} parent=5 // pred_region
      _
    $region24: #{down_module_forward.1} parent=5 // pred_fallthru
      _
    %p124 = scmp.le.s32.totalorder 1, %s8
    %p125 = scmp.lt.s32.totalorder %s8, 3
    %p126 = pnand %p124, %p125
    %p127 = pneg %p126
    // Predicated region
    $region25: #{down_module_forward.1} parent=5 // pred_check
      _
    $region26: #{down_module_forward.1} parent=5 // pred_check_branch
      %129 = sbr.rel (%p126) target = $region28
    $region27: #{down_module_forward.1} parent=5 // pred_region
      %s130 = ssub.s32 %s8, 1
      %s131 = smul.u32 16, %s18
      %p132 = scmp.lt.s32.totalorder %s131, 15
      %s133 = scalar_select %p132, %s131, 15
      %s134 = smul.addr %s133, 4
      %s135 = scalar_lea.vmem %s0, %s134
      %p136 = pneg %p46
      %p137 = pneg %p43
      %p138 = pneg %p67
      %p139 = pneg %p64
      %p140 = pneg %p93
      %p141 = pneg %p90
      %s142 = smul.u32 16, %s18
      %p143 = scmp.lt.s32.totalorder %s142, 15
      %s144 = scalar_select %p143, %s142, 15
      %s145 = smul.addr %s144, 8
      %s146 = scalar_lea.vmem %s2, %s145
      %s147 = smul.u32 16, %s18
      %p148 = scmp.lt.s32.totalorder %s147, 15
      %s149 = scalar_select %p148, %s147, 15
      %s150 = smul.addr %s149, 4
      %s151 = scalar_lea.vmem %s0, %s150
      %s152 = smul.u32 16, %s18
      %s153 = smul.u32 16, %s18
      %p154 = scmp.lt.s32.totalorder %s153, 15
      %s155 = scalar_select %p154, %s153, 15
      %s156 = smul.addr %s155, 8
      %s157 = scalar_lea.vmem %s2, %s156
      %s158 = smul.u32 16, %s18
      %p160 = scmp.eq.s32.totalorder %s17, 0
      // Predicated region
      $region29: #{down_module_forward.1} parent=27 // pred_check
        %p161 = pneg %p160
      $region30: #{down_module_forward.1} parent=27 // pred_check_branch
        %163 = sbr.rel (%p161) target = $region32
      $region31: #{down_module_forward.1} parent=27 // pred_region
        %p164 = scmp.eq.s32.totalorder %s18, 0
        // Predicated region
        $region33: #{down_module_forward.1} parent=31 // pred_check
          %p165 = pneg %p164
        $region34: #{down_module_forward.1} parent=31 // pred_check_branch
          %167 = sbr.rel (%p165) target = $region36
        $region35: #{down_module_forward.1} parent=31 // pred_region
          %168 = vst [vmem:[#allocation3] sm:$0x1] 0.0
          %169 = vst [vmem:[#allocation4] sm:$0x1] 0.0
        $region36: #{down_module_forward.1} parent=31 // pred_fallthru
          _
        %v170 = vld [vmem:[%s151] sm:$0xf]
        %v171 = vld [vmem:[%s151 + $0x4] sm:$0xf]
        %v172 = vld [vmem:[%s151 + $0x8] sm:$0xf]
        %v173 = vld [vmem:[%s151 + $0xc] sm:$0xf]
        %v174 = vld [vmem:[%s151 + $0x10] sm:$0xf]
        %v175 = vld [vmem:[%s151 + $0x14] sm:$0xf]
        %v176 = vld [vmem:[%s151 + $0x18] sm:$0xf]
        %v177 = vld [vmem:[%s151 + $0x1c] sm:$0xf]
        %v178 = vld [vmem:[%s151 + $0x20] sm:$0xf]
        %v179 = vld [vmem:[%s151 + $0x24] sm:$0xf]
        %v180 = vld [vmem:[%s151 + $0x28] sm:$0xf]
        %v181 = vld [vmem:[%s151 + $0x2c] sm:$0xf]
        %v182 = vld [vmem:[%s151 + $0x30] sm:$0xf]
        %v183 = vld [vmem:[%s151 + $0x34] sm:$0xf]
        %v184 = vld [vmem:[%s151 + $0x38] sm:$0xf]
        %v185 = vld [vmem:[%s151 + $0x3c] sm:$0xf]
        %v186 = vld [vmem:[%s1] sm:$0xf]
        %v187 = vld [vmem:[%s1 + $0x4] sm:$0xf]
        %v188 = vld [vmem:[%s1 + $0x8] sm:$0xf]
        %v189 = vld [vmem:[%s1 + $0xc] sm:$0xf]
        %v190 = vld [vmem:[%s1 + $0x10] sm:$0xf]
        %v191 = vld [vmem:[%s1 + $0x14] sm:$0xf]
        %v192 = vld [vmem:[%s1 + $0x18] sm:$0xf]
        %v193 = vld [vmem:[%s1 + $0x1c] sm:$0xf]
        %v210 = vunpack.c.l.b16 %v170
        %v211 = vunpack.c.l.b16 %v171
        %v212 = vunpack.c.l.b16 %v172
        %v213 = vunpack.c.l.b16 %v173
        %v214 = vunpack.c.l.b16 %v174
        %v215 = vunpack.c.l.b16 %v175
        %v216 = vunpack.c.l.b16 %v176
        %v217 = vunpack.c.l.b16 %v177
        %v218 = vunpack.c.l.b16 %v178
        %v219 = vunpack.c.l.b16 %v179
        %v220 = vunpack.c.l.b16 %v180
        %v221 = vunpack.c.l.b16 %v181
        %v222 = vunpack.c.l.b16 %v182
        %v223 = vunpack.c.l.b16 %v183
        %v224 = vunpack.c.l.b16 %v184
        %v225 = vunpack.c.l.b16 %v185
        %v226 = vpack.c.b16 %v211, %v210
        %v227 = vpack.c.b16 %v213, %v212
        %v228 = vpack.c.b16 %v215, %v214
        %v229 = vpack.c.b16 %v217, %v216
        %v230 = vpack.c.b16 %v219, %v218
        %v231 = vpack.c.b16 %v221, %v220
        %v232 = vpack.c.b16 %v223, %v222
        %v233 = vpack.c.b16 %v225, %v224
        %v242 = vunpack.c.l.b16 %v186
        %v243 = vunpack.c.l.b16 %v187
        %v244 = vunpack.c.l.b16 %v188
        %v245 = vunpack.c.l.b16 %v189
        %v246 = vunpack.c.l.b16 %v190
        %v247 = vunpack.c.l.b16 %v191
        %v248 = vunpack.c.l.b16 %v192
        %v249 = vunpack.c.l.b16 %v193
        %v250 = vpack.c.b16 %v243, %v242
        %v251 = vpack.c.b16 %v245, %v244
        %v252 = vpack.c.b16 %v247, %v246
        %v253 = vpack.c.b16 %v249, %v248
        %vm258 = vcmask 523264
        %v260 = vsel %vm258, %v226, 0
        %v263 = vsel %vm258, %v227, 0
        %v266 = vsel %vm258, %v228, 0
        %v269 = vsel %vm258, %v229, 0
        %v272 = vsel %vm258, %v230, 0
        %v275 = vsel %vm258, %v231, 0
        %v278 = vsel %vm258, %v232, 0
        %v281 = vsel %vm258, %v233, 0
        %283 = vmatprep.subr.bf16.mxu0 0
        %284 = vmatpush1.bf16.msra.mxu0 0
        %285 = vmatprep.subr.bf16.mxu0 0
        %286 = vmatpush1.bf16.msra.mxu0 0
        %287 = vmatprep.subr.bf16.mxu0 0
        %288 = vmatpush1.bf16.msra.mxu0 0
        %289 = vmatprep.subr.bf16.mxu0 0
        %290 = vmatpush1.bf16.msra.mxu0 0
        %291 = vmatprep.subr.bf16.mxu0 0
        %292 = vmatpush1.bf16.msra.mxu0 %v253
        %293 = vmatprep.subr.bf16.mxu0 0
        %294 = vmatpush1.bf16.msra.mxu0 %v252
        %295 = vmatprep.subr.bf16.mxu0 0
        %296 = vmatpush1.bf16.msra.mxu0 %v251
        %297 = vmatprep.subr.bf16.mxu0 0
        %298 = vmatpush1.bf16.msra.mxu0 %v250
        %299 = vmatprep.subr.bf16.mxu0 0
        %300 = vmatpush2.bf16.msra.mxu0 0
        %301 = vmatprep.subr.bf16.mxu0 0
        %302 = vmatpush2.bf16.msra.mxu0 0
        %303 = vmatprep.subr.bf16.mxu0 0
        %304 = vmatpush2.bf16.msra.mxu0 0
        %305 = vmatprep.subr.bf16.mxu0 0
        %306 = vmatpush2.bf16.msra.mxu0 0
        %307 = vmatprep.subr.bf16.mxu0 0
        %308 = vmatpush2.bf16.msra.mxu0 0
        %309 = vmatprep.subr.bf16.mxu0 0
        %310 = vmatpush2.bf16.msra.mxu0 0
        %311 = vmatprep.subr.bf16.mxu0 0
        %312 = vmatpush2.bf16.msra.mxu0 0
        %313 = vmatprep.subr.bf16.mxu0 0
        %314 = vmatpush2.bf16.msra.mxu0 0
        %315 = vmatprep.mubr.bf16.mxu0 0
        %316 = vmatmul.mubr.bf16.gmra.mxu0 %v260
        %v317 = vpop.f32.mrf.mxu0
        %v318 = vadd.f32 0.0, %v317
        %v319 = vpop.f32.mrf.mxu0
        %v320 = vpop.f32.mrf.mxu0
        %v321 = vadd.f32 0.0, %v320
        %v322 = vpop.f32.mrf.mxu0
        %323 = vmatprep.mubr.bf16.mxu0 0
        %324 = vmatmul.mubr.bf16.gmra.mxu0 %v263
        %v325 = vpop.f32.mrf.mxu0
        %v326 = vadd.f32 0.0, %v325
        %v327 = vpop.f32.mrf.mxu0
        %v328 = vpop.f32.mrf.mxu0
        %v329 = vadd.f32 0.0, %v328
        %v330 = vpop.f32.mrf.mxu0
        %331 = vmatprep.mubr.bf16.mxu0 0
        %332 = vmatmul.mubr.bf16.gmra.mxu0 %v266
        %v333 = vpop.f32.mrf.mxu0
        %v334 = vadd.f32 0.0, %v333
        %v335 = vpop.f32.mrf.mxu0
        %v336 = vpop.f32.mrf.mxu0
        %v337 = vadd.f32 0.0, %v336
        %v338 = vpop.f32.mrf.mxu0
        %339 = vmatprep.mubr.bf16.mxu0 0
        %340 = vmatmul.mubr.bf16.gmra.mxu0 %v269
        %v341 = vpop.f32.mrf.mxu0
        %v342 = vadd.f32 0.0, %v341
        %v343 = vpop.f32.mrf.mxu0
        %v344 = vpop.f32.mrf.mxu0
        %v345 = vadd.f32 0.0, %v344
        %v346 = vpop.f32.mrf.mxu0
        %347 = vmatprep.mubr.bf16.mxu0 0
        %348 = vmatmul.mubr.bf16.gmra.mxu0 %v272
        %v349 = vpop.f32.mrf.mxu0
        %v350 = vadd.f32 0.0, %v349
        %v351 = vpop.f32.mrf.mxu0
        %v352 = vpop.f32.mrf.mxu0
        %v353 = vadd.f32 0.0, %v352
        %v354 = vpop.f32.mrf.mxu0
        %355 = vmatprep.mubr.bf16.mxu0 0
        %356 = vmatmul.mubr.bf16.gmra.mxu0 %v275
        %v357 = vpop.f32.mrf.mxu0
        %v358 = vadd.f32 0.0, %v357
        %v359 = vpop.f32.mrf.mxu0
        %v360 = vpop.f32.mrf.mxu0
        %v361 = vadd.f32 0.0, %v360
        %v362 = vpop.f32.mrf.mxu0
        %363 = vmatprep.mubr.bf16.mxu0 0
        %364 = vmatmul.mubr.bf16.gmra.mxu0 %v278
        %v365 = vpop.f32.mrf.mxu0
        %v366 = vadd.f32 0.0, %v365
        %v367 = vpop.f32.mrf.mxu0
        %v368 = vpop.f32.mrf.mxu0
        %v369 = vadd.f32 0.0, %v368
        %v370 = vpop.f32.mrf.mxu0
        %371 = vmatprep.mubr.bf16.mxu0 0
        %372 = vmatmul.mubr.bf16.gmra.mxu0 %v281
        %v373 = vpop.f32.mrf.mxu0
        %v374 = vadd.f32 0.0, %v373
        %v375 = vpop.f32.mrf.mxu0
        %v376 = vpop.f32.mrf.mxu0
        %v377 = vadd.f32 0.0, %v376
        %v378 = vpop.f32.mrf.mxu0
        %379 = vdwg.mxu0
        %s380 = smul.u32 %s18, 128
        %s381 = scalar_lea.vmem [#allocation2], %s380
        %382 = vst [vmem:[%s381] sm:$0xff] %v318
        %383 = vst [vmem:[%s381 + $0x8] sm:$0xff] %v321
        %384 = vst [vmem:[%s381 + $0x10] sm:$0xff] %v326
        %385 = vst [vmem:[%s381 + $0x18] sm:$0xff] %v329
        %386 = vst [vmem:[%s381 + $0x20] sm:$0xff] %v334
        %387 = vst [vmem:[%s381 + $0x28] sm:$0xff] %v337
        %388 = vst [vmem:[%s381 + $0x30] sm:$0xff] %v342
        %389 = vst [vmem:[%s381 + $0x38] sm:$0xff] %v345
        %390 = vst [vmem:[%s381 + $0x40] sm:$0xff] %v350
        %391 = vst [vmem:[%s381 + $0x48] sm:$0xff] %v353
        %392 = vst [vmem:[%s381 + $0x50] sm:$0xff] %v358
        %393 = vst [vmem:[%s381 + $0x58] sm:$0xff] %v361
        %394 = vst [vmem:[%s381 + $0x60] sm:$0xff] %v366
        %395 = vst [vmem:[%s381 + $0x68] sm:$0xff] %v369
        %396 = vst [vmem:[%s381 + $0x70] sm:$0xff] %v374
        %397 = vst [vmem:[%s381 + $0x78] sm:$0xff] %v377
        %v398 = vld [vmem:[#allocation3] sm:$0x1]
        %v399 = vadd.f32 %v318, %v321
        %v400 = vadd.f32 %v399, %v326
        %v401 = vadd.f32 %v400, %v329
        %v402 = vadd.f32 %v401, %v334
        %v403 = vadd.f32 %v402, %v337
        %v404 = vadd.f32 %v403, %v342
        %v405 = vadd.f32 %v404, %v345
        %v406 = vadd.f32 %v405, %v350
        %v407 = vadd.f32 %v406, %v353
        %v408 = vadd.f32 %v407, %v358
        %v409 = vadd.f32 %v408, %v361
        %v410 = vadd.f32 %v409, %v366
        %v411 = vadd.f32 %v410, %v369
        %v412 = vadd.f32 %v411, %v374
        %v413 = vadd.f32 %v412, %v377
        %v414 = vrot.slane %v413, 4
        %v415 = vadd.f32 %v413, %v414
        %v416 = vrot.slane %v415, 2
        %v417 = vadd.f32 %v415, %v416
        %v418 = vrot.slane %v417, 1
        %v419 = vadd.f32 %v417, %v418
        %v420 = vadd.f32 %v398, %v419
        %421 = vst [vmem:[#allocation3] sm:$0x1] %v420
        %v422 = vld [vmem:[#allocation4] sm:$0x1]
        %v423 = vmul.f32 %v318, %v318
        %v424 = vmul.f32 %v321, %v321
        %v425 = vmul.f32 %v326, %v326
        %v426 = vmul.f32 %v329, %v329
        %v427 = vmul.f32 %v334, %v334
        %v428 = vmul.f32 %v337, %v337
        %v429 = vmul.f32 %v342, %v342
        %v430 = vmul.f32 %v345, %v345
        %v431 = vmul.f32 %v350, %v350
        %v432 = vmul.f32 %v353, %v353
        %v433 = vmul.f32 %v358, %v358
        %v434 = vmul.f32 %v361, %v361
        %v435 = vmul.f32 %v366, %v366
        %v436 = vmul.f32 %v369, %v369
        %v437 = vmul.f32 %v374, %v374
        %v438 = vmul.f32 %v377, %v377
        %v439 = vadd.f32 %v423, %v424
        %v440 = vadd.f32 %v439, %v425
        %v441 = vadd.f32 %v440, %v426
        %v442 = vadd.f32 %v441, %v427
        %v443 = vadd.f32 %v442, %v428
        %v444 = vadd.f32 %v443, %v429
        %v445 = vadd.f32 %v444, %v430
        %v446 = vadd.f32 %v445, %v431
        %v447 = vadd.f32 %v446, %v432
        %v448 = vadd.f32 %v447, %v433
        %v449 = vadd.f32 %v448, %v434
        %v450 = vadd.f32 %v449, %v435
        %v451 = vadd.f32 %v450, %v436
        %v452 = vadd.f32 %v451, %v437
        %v453 = vadd.f32 %v452, %v438
        %v454 = vrot.slane %v453, 4
        %v455 = vadd.f32 %v453, %v454
        %v456 = vrot.slane %v455, 2
        %v457 = vadd.f32 %v455, %v456
        %v458 = vrot.slane %v457, 1
        %v459 = vadd.f32 %v457, %v458
        %v460 = vadd.f32 %v422, %v459
        %461 = vst [vmem:[#allocation4] sm:$0x1] %v460
        %462 = vst [vmem:[%s157] sm:$0xff] %v318
        %463 = vst [vmem:[%s157 + $0x8] sm:$0xff] %v321
        %464 = vst [vmem:[%s157 + $0x10] sm:$0xff] %v326
        %465 = vst [vmem:[%s157 + $0x18] sm:$0xff] %v329
        %466 = vst [vmem:[%s157 + $0x20] sm:$0xff] %v334
        %467 = vst [vmem:[%s157 + $0x28] sm:$0xff] %v337
        %468 = vst [vmem:[%s157 + $0x30] sm:$0xff] %v342
        %469 = vst [vmem:[%s157 + $0x38] sm:$0xff] %v345
        %470 = vst [vmem:[%s157 + $0x40] sm:$0xff] %v350
        %471 = vst [vmem:[%s157 + $0x48] sm:$0xff] %v353
        %472 = vst [vmem:[%s157 + $0x50] sm:$0xff] %v358
        %473 = vst [vmem:[%s157 + $0x58] sm:$0xff] %v361
        %474 = vst [vmem:[%s157 + $0x60] sm:$0xff] %v366
        %475 = vst [vmem:[%s157 + $0x68] sm:$0xff] %v369
        %476 = vst [vmem:[%s157 + $0x70] sm:$0xff] %v374
        %477 = vst [vmem:[%s157 + $0x78] sm:$0xff] %v377
      $region32: #{down_module_forward.1} parent=27 // pred_fallthru
        _
      %p478 = scmp.eq.s32.totalorder %s17, 1
      // Predicated region
      $region37: #{down_module_forward.1} parent=27 // pred_check
        %p479 = pneg %p478
      $region38: #{down_module_forward.1} parent=27 // pred_check_branch
        %481 = sbr.rel (%p479) target = $region40
      $region39: #{down_module_forward.1} parent=27 // pred_region
        %s482 = smul.u32 %s18, 128
        %s483 = scalar_lea.vmem [#allocation2], %s482
        %v484 = vld [vmem:[%s483] sm:$0xff]
        %v485 = vld [vmem:[%s483 + $0x8] sm:$0xff]
        %v486 = vld [vmem:[%s483 + $0x10] sm:$0xff]
        %v487 = vld [vmem:[%s483 + $0x18] sm:$0xff]
        %v488 = vld [vmem:[%s483 + $0x20] sm:$0xff]
        %v489 = vld [vmem:[%s483 + $0x28] sm:$0xff]
        %v490 = vld [vmem:[%s483 + $0x30] sm:$0xff]
        %v491 = vld [vmem:[%s483 + $0x38] sm:$0xff]
        %v492 = vld [vmem:[%s483 + $0x40] sm:$0xff]
        %v493 = vld [vmem:[%s483 + $0x48] sm:$0xff]
        %v494 = vld [vmem:[%s483 + $0x50] sm:$0xff]
        %v495 = vld [vmem:[%s483 + $0x58] sm:$0xff]
        %v496 = vld [vmem:[%s483 + $0x60] sm:$0xff]
        %v497 = vld [vmem:[%s483 + $0x68] sm:$0xff]
        %v498 = vld [vmem:[%s483 + $0x70] sm:$0xff]
        %v499 = vld [vmem:[%s483 + $0x78] sm:$0xff]
        %v500 = vld [vmem:[#allocation3] sm:$0x1]
        %v501 = vmul.f32 %v500, 0.0078125
        %v502 = vld [vmem:[#allocation4] sm:$0x1]
        %v503 = vmul.f32 %v502, 0.0078125
        %v504 = vmul.f32 %v501, %v501
        %v505 = vsub.f32 %v503, %v504
        %v507 = vlaneseq
        %v508 = vshrl.u32 %v507, 7
        %v509 = vsub.s32 0, %v508
        %v510 = vrot.slane %v501, %v509
        %v512 = vsub.f32 %v484, %v510
        %v513 = vsub.f32 %v485, %v510
        %v514 = vsub.f32 %v486, %v510
        %v515 = vsub.f32 %v487, %v510
        %v516 = vsub.f32 %v488, %v510
        %v517 = vsub.f32 %v489, %v510
        %v518 = vsub.f32 %v490, %v510
        %v519 = vsub.f32 %v491, %v510
        %v520 = vsub.f32 %v492, %v510
        %v521 = vsub.f32 %v493, %v510
        %v522 = vsub.f32 %v494, %v510
        %v523 = vsub.f32 %v495, %v510
        %v524 = vsub.f32 %v496, %v510
        %v525 = vsub.f32 %v497, %v510
        %v526 = vsub.f32 %v498, %v510
        %v527 = vsub.f32 %v499, %v510
        %v528 = vadd.f32 %v505, 1e-05
        %v529 = vrsqrt.pop %v528
        %v531 = vlaneseq
        %v532 = vshrl.u32 %v531, 7
        %v533 = vsub.s32 0, %v532
        %v534 = vrot.slane %v529, %v533
        %v536 = vmul.f32 %v512, %v534
        %v537 = vmul.f32 %v513, %v534
        %v538 = vmul.f32 %v514, %v534
        %v539 = vmul.f32 %v515, %v534
        %v540 = vmul.f32 %v516, %v534
        %v541 = vmul.f32 %v517, %v534
        %v542 = vmul.f32 %v518, %v534
        %v543 = vmul.f32 %v519, %v534
        %v544 = vmul.f32 %v520, %v534
        %v545 = vmul.f32 %v521, %v534
        %v546 = vmul.f32 %v522, %v534
        %v547 = vmul.f32 %v523, %v534
        %v548 = vmul.f32 %v524, %v534
        %v549 = vmul.f32 %v525, %v534
        %v550 = vmul.f32 %v526, %v534
        %v551 = vmul.f32 %v527, %v534
        %vm552 = vcmp.ge.f32.partialorder %v536, 0.0
        %vm553 = vcmp.ge.f32.partialorder %v537, 0.0
        %vm554 = vcmp.ge.f32.partialorder %v538, 0.0
        %vm555 = vcmp.ge.f32.partialorder %v539, 0.0
        %vm556 = vcmp.ge.f32.partialorder %v540, 0.0
        %vm557 = vcmp.ge.f32.partialorder %v541, 0.0
        %vm558 = vcmp.ge.f32.partialorder %v542, 0.0
        %vm559 = vcmp.ge.f32.partialorder %v543, 0.0
        %vm560 = vcmp.ge.f32.partialorder %v544, 0.0
        %vm561 = vcmp.ge.f32.partialorder %v545, 0.0
        %vm562 = vcmp.ge.f32.partialorder %v546, 0.0
        %vm563 = vcmp.ge.f32.partialorder %v547, 0.0
        %vm564 = vcmp.ge.f32.partialorder %v548, 0.0
        %vm565 = vcmp.ge.f32.partialorder %v549, 0.0
        %vm566 = vcmp.ge.f32.partialorder %v550, 0.0
        %vm567 = vcmp.ge.f32.partialorder %v551, 0.0
        %v568 = vmul.f32 %v536, 0.3
        %v569 = vmul.f32 %v537, 0.3
        %v570 = vmul.f32 %v538, 0.3
        %v571 = vmul.f32 %v539, 0.3
        %v572 = vmul.f32 %v540, 0.3
        %v573 = vmul.f32 %v541, 0.3
        %v574 = vmul.f32 %v542, 0.3
        %v575 = vmul.f32 %v543, 0.3
        %v576 = vmul.f32 %v544, 0.3
        %v577 = vmul.f32 %v545, 0.3
        %v578 = vmul.f32 %v546, 0.3
        %v579 = vmul.f32 %v547, 0.3
        %v580 = vmul.f32 %v548, 0.3
        %v581 = vmul.f32 %v549, 0.3
        %v582 = vmul.f32 %v550, 0.3
        %v583 = vmul.f32 %v551, 0.3
        %v584 = vsel %vm552, %v536, %v568
        %v585 = vsel %vm553, %v537, %v569
        %v586 = vsel %vm554, %v538, %v570
        %v587 = vsel %vm555, %v539, %v571
        %v588 = vsel %vm556, %v540, %v572
        %v589 = vsel %vm557, %v541, %v573
        %v590 = vsel %vm558, %v542, %v574
        %v591 = vsel %vm559, %v543, %v575
        %v592 = vsel %vm560, %v544, %v576
        %v593 = vsel %vm561, %v545, %v577
        %v594 = vsel %vm562, %v546, %v578
        %v595 = vsel %vm563, %v547, %v579
        %v596 = vsel %vm564, %v548, %v580
        %v597 = vsel %vm565, %v549, %v581
        %v598 = vsel %vm566, %v550, %v582
        %v599 = vsel %vm567, %v551, %v583
        %600 = vst [vmem:[%s157] sm:$0xff] %v584
        %601 = vst [vmem:[%s157 + $0x8] sm:$0xff] %v585
        %602 = vst [vmem:[%s157 + $0x10] sm:$0xff] %v586
        %603 = vst [vmem:[%s157 + $0x18] sm:$0xff] %v587
        %604 = vst [vmem:[%s157 + $0x20] sm:$0xff] %v588
        %605 = vst [vmem:[%s157 + $0x28] sm:$0xff] %v589
        %606 = vst [vmem:[%s157 + $0x30] sm:$0xff] %v590
        %607 = vst [vmem:[%s157 + $0x38] sm:$0xff] %v591
        %608 = vst [vmem:[%s157 + $0x40] sm:$0xff] %v592
        %609 = vst [vmem:[%s157 + $0x48] sm:$0xff] %v593
        %610 = vst [vmem:[%s157 + $0x50] sm:$0xff] %v594
        %611 = vst [vmem:[%s157 + $0x58] sm:$0xff] %v595
        %612 = vst [vmem:[%s157 + $0x60] sm:$0xff] %v596
        %613 = vst [vmem:[%s157 + $0x68] sm:$0xff] %v597
        %614 = vst [vmem:[%s157 + $0x70] sm:$0xff] %v598
        %615 = vst [vmem:[%s157 + $0x78] sm:$0xff] %v599
      $region40: #{down_module_forward.1} parent=27 // pred_fallthru
        _
      %s616 = smul.u32 16, %s18
      %p617 = scmp.lt.s32.totalorder %s616, 15
      %s618 = scalar_select %p617, %s616, 15
      %s619 = smul.addr %s618, 8
      %s620 = scalar_lea.vmem %s2, %s619
      // Predicated region
      $region41: #{down_module_forward.1} parent=27 // pred_check
        %p621 = pneg %p90
      $region42: #{down_module_forward.1} parent=27 // pred_check_branch
        %623 = sbr.rel (%p621) target = $region44
      $region43: #{down_module_forward.1} parent=27 // pred_region
        %s624 = smul.u32 16, %s18
      $region44: #{down_module_forward.1} parent=27 // pred_fallthru
        _
      // Predicated region
      $region45: #{down_module_forward.1} parent=27 // pred_check
        %p625 = pneg %p90
      $region46: #{down_module_forward.1} parent=27 // pred_check_branch
        %627 = sbr.rel (%p625) target = $region48
      $region47: #{down_module_forward.1} parent=27 // pred_region
        %s628 = smul.u32 16, %s18
        %p629 = scmp.lt.s32.totalorder %s628, 15
        %s630 = scalar_select %p629, %s628, 15
        %s631 = smul.addr %s630, 8
        %s632 = scalar_lea.vmem %s2, %s631
      $region48: #{down_module_forward.1} parent=27 // pred_fallthru
        _
    $region28: #{down_module_forward.1} parent=5 // pred_fallthru
      _
    %p633 = scmp.le.s32.totalorder 2, %s8
    // Predicated region
    $region49: #{down_module_forward.1} parent=5 // pred_check
      %p634 = pneg %p633
    $region50: #{down_module_forward.1} parent=5 // pred_check_branch
      %636 = sbr.rel (%p634) target = $region52
    $region51: #{down_module_forward.1} parent=5 // pred_region
      %s637 = ssub.s32 %s8, 2
    $region52: #{down_module_forward.1} parent=5 // pred_fallthru
      _
  $region6: #{down_module_forward.1} parent=0 // loop_footer
    %s12 = sadd.s32 1, %s8
  $region7: #{down_module_forward.1} parent=0 // loop_footer_branch
    %7 = sbr.rel target = $region3
  $region8: #{down_module_forward.1} parent=0 // loop_exit
    _

</llo_original>
